<compile_context>
chip_gen: v6e
topology: v6e:2x2x1
jax: 0.10.0
libtpu: 0.0.40
codegen_flags: <defaults>
</compile_context>

<pallas_src>
import math

import numpy as np
import jax
import jax.numpy as jnp
from jax.experimental import pallas as pl
from jax.experimental.pallas import tpu as pltpu


def _round_up(v: int, m: int) -> int:
    return ((v + m - 1) // m) * m


def _sinusoidal_kernel(x_ref, sel_ref, out_ref):
    # x_ref:   (tb, K)        f32  -- fold timesteps per row, then a 1.0 column, zero pad
    # sel_ref: (K, out_cols)  f32  -- freq-selector rows, phase row, zero pad rows
    # out_ref: (tb, out_cols) f32
    emb = jnp.dot(x_ref[...], sel_ref[...],
                  preferred_element_type=jnp.float32,
                  precision=jax.lax.Precision.HIGHEST)   # MXU: broadcast * freq + phase
    out_ref[...] = jnp.sin(emb)                          # one full-width transcendental


def sinusoidal_pos_emb(x: jax.Array, dim: int, *,
                       target_tile_bytes: int = 2 * 1024 * 1024) -> jax.Array:
    """x: (B,) timesteps -> (B, dim) float32 sinusoidal embedding."""
    assert dim % 2 == 0, "SinusoidalPosEmb requires an even dim"
    half_dim = dim // 2
    assert half_dim > 1, "dim must be >= 4 (half_dim - 1 would be zero)"
    neg_log_scale = -math.log(10000.0) / (half_dim - 1)

    b = int(x.shape[0])

    # --- fold several timesteps per kernel row so the store is lane-dense --------
    fold = 128 // math.gcd(dim, 128)
    if fold * dim > 8192:          # keep sel/out_cols small; huge dims are already
        fold = 1                   # (mostly) lane-dense on their own
    out_cols = fold * dim

    # --- byte-targeted row tile; aim for ~4 grid steps when the batch allows -----
    bytes_per_row = out_cols * 4
    bf_raw = max(1, -(-b // fold))                                   # ceil(b / fold)
    tb_bytes = max(8, (target_tile_bytes // bytes_per_row) // 8 * 8)
    tb_split = max(8, _round_up(-(-bf_raw // 4), 8))                 # 2 TCs on v7x
    tb = min(tb_bytes, tb_split, _round_up(bf_raw, 8))
    bf = _round_up(bf_raw, tb)          # padded folded batch -> grid divides exactly
    b_pad = bf * fold
    grid = (bf // tb,)

    # --- constant selector: rows [0:fold) = per-block freqs, row `fold` = phase ---
    k_dim = _round_up(fold + 1, 8)      # pad contraction dim to a sublane multiple
    cols = np.arange(out_cols)
    within = cols % dim                                   # index inside one embedding
    freqs = jnp.exp(jnp.arange(half_dim, dtype=jnp.float32) * neg_log_scale)
    freq_full = freqs[within % half_dim]                  # (out_cols,) f32
    onehot = (np.arange(fold)[:, None] == (cols // dim)[None, :])    # (fold, out_cols)
    sel = jnp.zeros((k_dim, out_cols), jnp.float32)
    sel = sel.at[:fold, :].set(jnp.asarray(onehot, jnp.float32) * freq_full[None, :])
    phase = jnp.where(within >= half_dim, jnp.float32(math.pi / 2.0), jnp.float32(0.0))
    sel = sel.at[fold, :].set(phase)                      # cos(t) = sin(t + pi/2)

    # --- pack x: fold timesteps per row + a constant-1 column for the phase -------
    xf = jnp.pad(x.astype(jnp.float32), (0, b_pad - b)).reshape(bf, fold)
    x_aug = jnp.zeros((bf, k_dim), jnp.float32)
    x_aug = x_aug.at[:, :fold].set(xf)
    x_aug = x_aug.at[:, fold].set(1.0)

    out_folded = pl.pallas_call(
        _sinusoidal_kernel,
        out_shape=jax.ShapeDtypeStruct((bf, out_cols), jnp.float32),
        grid=grid,
        in_specs=[
            pl.BlockSpec((tb, k_dim), lambda i: (i, 0)),
            pl.BlockSpec((k_dim, out_cols), lambda i: (0, 0)),   # resident constant
        ],
        out_specs=pl.BlockSpec((tb, out_cols), lambda i: (i, 0)),
        compiler_params=pltpu.CompilerParams(
            dimension_semantics=("parallel",),   # batch rows across v7x's 2 TCs
        ),
    )(x_aug, sel)

    # Unfold: row-major reshape reproduces the per-timestep [sin | cos] layout.
    return out_folded.reshape(b_pad, dim)[:b]


def _reference(x: jax.Array, dim: int) -> jax.Array:
    half_dim = dim // 2
    scale = math.log(10000.0) / (half_dim - 1)
    freqs = jnp.exp(jnp.arange(half_dim, dtype=jnp.float32) * -scale)
    emb = x.astype(jnp.float32)[:, None] * freqs[None, :]
    return jnp.concatenate([jnp.sin(emb), jnp.cos(emb)], axis=-1)


if __name__ == "__main__":
    key = jax.random.PRNGKey(0)
    # Small shapes consistent with the module: (B,) diffusion-style timesteps.
    for batch, dim in [(8, 32), (256, 128)]:
        key, sub = jax.random.split(key)
        x = jax.random.uniform(sub, (batch,), dtype=jnp.float32,
                               minval=0.0, maxval=1000.0)
        out = jax.block_until_ready(sinusoidal_pos_emb(x, dim))
        ref = _reference(x, dim)
        assert out.shape == (batch, dim), out.shape
        assert out.dtype == jnp.float32, out.dtype
        # Tolerance: the MXU multi-pass product and cos(t)=sin(t+pi/2) can differ
        # from the XLA reference by a few ULPs of the sin *argument* (|arg| <= 1e3,
        # ulp ~ 6e-5); outputs live in [-1, 1], so 1e-3 remains a tight check.
        err = float(jnp.max(jnp.abs(out - ref)))
        assert err < 1e-3, f"max |err| = {err}"
    print("KERNEL_OK")
</pallas_src>

<mosaic_0001>
module attributes {stable_mosaic.version = 11 : i64} {
  func.func @_sinusoidal_kernel(%arg0: i32, %arg1: memref<8x8xf32, #tpu.memory_space<vmem>>, %arg2: memref<8x128xf32, #tpu.memory_space<vmem>>, %arg3: memref<8x128xf32, #tpu.memory_space<vmem>>) attributes {dimension_semantics = [#tpu.dimension_semantics<parallel>], iteration_bounds = array<i64: 1>, scalar_prefetch = 0 : i64, scratch_operands = 0 : i64, tpu.core_type = #tpu.core_type<tc>, window_params = [{transform_indices = @transform_0, window_bounds = array<i64: 8, 8>}, {pipeline_mode = #tpu.pipeline_mode<synchronous>, transform_indices = @transform_1, window_bounds = array<i64: 8, 128>}, {transform_indices = @transform_2, window_bounds = array<i64: 8, 128>}]} {
    %c0 = arith.constant 0 : index
    %c0_0 = arith.constant 0 : index
    %0 = vector.load %arg1[%c0, %c0_0] : memref<8x8xf32, #tpu.memory_space<vmem>>, vector<8x8xf32>
    %c0_1 = arith.constant 0 : index
    %c0_2 = arith.constant 0 : index
    %1 = vector.load %arg2[%c0_1, %c0_2] : memref<8x128xf32, #tpu.memory_space<vmem>>, vector<8x128xf32>
    %cst = arith.constant dense<0.000000e+00> : vector<8x128xf32>
    %2 = tpu.matmul %0, %1, %cst {dimension_numbers = #tpu.dot_dimension_numbers<[1], [0], [0], [1], [0, 0, 1, 1], [], []>, precision = #tpu.contract_precision<fp32>} : vector<8x8xf32>, vector<8x128xf32>, vector<8x128xf32> -> vector<8x128xf32>
    %3 = math.sin %2 : vector<8x128xf32>
    %c0_3 = arith.constant 0 : index
    %c0_4 = arith.constant 0 : index
    %4 = vector.load %arg3[%c0_3, %c0_4] : memref<8x128xf32, #tpu.memory_space<vmem>>, vector<8x128xf32>
    tpu.vector_store %arg3[%c0_3, %c0_4], %3 {strides = array<i32>} : memref<8x128xf32, #tpu.memory_space<vmem>>, vector<8x128xf32>,
    return
  }
  func.func @transform_0(%arg0: i32) -> (i32, i32) {
    %c0_i32 = arith.constant 0 : i32
    %c0_i32_0 = arith.constant 0 : i32
    return %arg0, %c0_i32 : i32, i32
  }
  func.func @transform_1(%arg0: i32) -> (i32, i32) {
    %c0_i32 = arith.constant 0 : i32
    %c0_i32_0 = arith.constant 0 : i32
    %c0_i32_1 = arith.constant 0 : i32
    return %c0_i32, %c0_i32_0 : i32, i32
  }
  func.func @transform_2(%arg0: i32) -> (i32, i32) {
    %c0_i32 = arith.constant 0 : i32
    %c0_i32_0 = arith.constant 0 : i32
    return %arg0, %c0_i32 : i32, i32
  }
}

</mosaic_0001>

<llo_original>
// kernel: tpu_custom_call.1
$region0: #{tpu_custom_call.1}
  #allocation0 [shape = 'u32[]', space=smem, size = 0x4, offset = 0x4, fixed_abs, tag = 'smem constant byte address 0x4 - core index']
  #allocation1 [shape = 'u32[144,128]{1,0:T(1,128)}', space=vmem, size = 0x12000, scoped, tag = 'internal scratch']
  %s0 = inlined_call_operand.hbm [shape: f32[8,8], index: 0, kind: input, shape index: {}]
  %s1 = inlined_call_operand.hbm [shape: f32[8,128], index: 1, kind: input, shape index: {}]
  %s2 = inlined_call_operand.hbm [shape: f32[8,128], index: 2, kind: output, shape index: {}]
  %s3 = sld [smem:[#allocation0]]
  $region26: #{tpu_custom_call.1} parent=0
    _
  %s5 = ssub.s32 1, %s3
  %s6 = scalar_select 0, %s5, %s3
  $region1: #{tpu_custom_call.1} parent=0
    #allocation2 [shape = 'u8[4096]{0}', space=vmem, size = 0x1000, scoped, tag = 'input window, operand 0, single buffered']
    #allocation3 [shape = 's32[1]{0}', space=sflag, size = 0x4, scoped, tag = 'scoped memory for tpu_custom_call.1']
    #allocation4 [shape = 's32[1]{0}', space=sflag, size = 0x4, scoped, tag = 'scoped memory for tpu_custom_call.1']
    #allocation5 [shape = 'u8[4096]{0}', space=vmem, size = 0x1000, scoped, tag = 'input window, operand 1, single buffered']
    #allocation6 [shape = 's32[1]{0}', space=sflag, size = 0x4, scoped, tag = 'scoped memory for tpu_custom_call.1']
    #allocation7 [shape = 'u8[4096]{0}', space=vmem, size = 0x1000, scoped, tag = 'output window, operand 0, single buffered']
    %7 = vsyncpa [#allocation3], 0
    %8 = vsyncpa [#allocation6], 0
    %9 = vsyncpa [#allocation4], 0
    // Predicated region
    $region2: #{tpu_custom_call.1} parent=1 // pred_check
      _
    $region3: #{tpu_custom_call.1} parent=1 // pred_check_branch
      %11 = sbr.rel (0) target = $region5
    $region4: #{tpu_custom_call.1} parent=1 // pred_region
      %s13 = ssub.s32 128, 128
      %14 = vsyncadd [#allocation3], %s13
      %s16 = sshll.u32 [#allocation2], 4
      %s17 = int_to_ptr.vmem [resolvable:$true] %s16
      %19 = dma.hbm_to_vmem [thread:$0]  %s0, 128, %s17, [#allocation3]
    $region5: #{tpu_custom_call.1} parent=1 // pred_fallthru
      _
    // Predicated region
    $region6: #{tpu_custom_call.1} parent=1 // pred_check
      _
    $region7: #{tpu_custom_call.1} parent=1 // pred_check_branch
      %21 = sbr.rel (0) target = $region9
    $region8: #{tpu_custom_call.1} parent=1 // pred_region
      %s23 = ssub.s32 128, 128
      %24 = vsyncadd [#allocation6], %s23
      %s26 = sshll.u32 [#allocation5], 4
      %s27 = int_to_ptr.vmem [resolvable:$true] %s26
      %29 = dma.hbm_to_vmem [thread:$0]  %s1, 128, %s27, [#allocation6]
    $region9: #{tpu_custom_call.1} parent=1 // pred_fallthru
      _
    // Predicated region
    $region10: #{tpu_custom_call.1} parent=1 // pred_check
      _
    $region11: #{tpu_custom_call.1} parent=1 // pred_check_branch
      %31 = sbr.rel (0) target = $region13
    $region12: #{tpu_custom_call.1} parent=1 // pred_region
      %32 = dma.done [#allocation3], 128
    $region13: #{tpu_custom_call.1} parent=1 // pred_fallthru
      _
    // Predicated region
    $region14: #{tpu_custom_call.1} parent=1 // pred_check
      _
    $region15: #{tpu_custom_call.1} parent=1 // pred_check_branch
      %34 = sbr.rel (0) target = $region17
    $region16: #{tpu_custom_call.1} parent=1 // pred_region
      %35 = dma.done [#allocation6], 128
    $region17: #{tpu_custom_call.1} parent=1 // pred_fallthru
      _
    %v36 = vld [vmem:[#allocation2] sm:$0xff]
    %v37 = vld [vmem:[#allocation5] sm:$0xff]
    %vm38 = vcmask 64512
    %v40 = vsel %vm38, %v36, 0
    %42 = vmatprep.subr.mxu0 0.0
    %43 = vmatpush1.msra.mxu0 0.0
    %44 = vmatprep.subr.mxu0 0.0
    %45 = vmatpush1.msra.mxu0 0.0
    %46 = vmatprep.subr.mxu0 0.0
    %47 = vmatpush1.msra.mxu0 0.0
    %48 = vmatprep.subr.mxu0 0.0
    %49 = vmatpush1.msra.mxu0 0.0
    %50 = vmatprep.subr.mxu0 0.0
    %51 = vmatpush1.msra.mxu0 0.0
    %52 = vmatprep.subr.mxu0 0.0
    %53 = vmatpush1.msra.mxu0 0.0
    %54 = vmatprep.subr.mxu0 0.0
    %55 = vmatpush1.msra.mxu0 0.0
    %56 = vmatprep.subr.mxu0 0.0
    %57 = vmatpush1.msra.mxu0 0.0
    %58 = vmatprep.subr.mxu0 0.0
    %59 = vmatpush1.msra.mxu0 0.0
    %60 = vmatprep.subr.mxu0 0.0
    %61 = vmatpush1.msra.mxu0 0.0
    %62 = vmatprep.subr.mxu0 0.0
    %63 = vmatpush1.msra.mxu0 0.0
    %64 = vmatprep.subr.mxu0 0.0
    %65 = vmatpush1.msra.mxu0 0.0
    %66 = vmatprep.subr.mxu0 0.0
    %67 = vmatpush1.msra.mxu0 0.0
    %68 = vmatprep.subr.mxu0 0.0
    %69 = vmatpush1.msra.mxu0 0.0
    %70 = vmatprep.subr.mxu0 0.0
    %71 = vmatpush1.msra.mxu0 0.0
    %72 = vmatprep.subr.mxu0 0.0
    %v73 = vand.u32 %v37, 4294901760
    %74 = vmatpush1.msra.mxu0 %v73
    %75 = vmatprep.subr.mxu0 0.0
    %76 = vmatpush2.msra.mxu0 0.0
    %77 = vmatprep.subr.mxu0 0.0
    %78 = vmatpush2.msra.mxu0 0.0
    %79 = vmatprep.subr.mxu0 0.0
    %80 = vmatpush2.msra.mxu0 0.0
    %81 = vmatprep.subr.mxu0 0.0
    %82 = vmatpush2.msra.mxu0 0.0
    %83 = vmatprep.subr.mxu0 0.0
    %84 = vmatpush2.msra.mxu0 0.0
    %85 = vmatprep.subr.mxu0 0.0
    %86 = vmatpush2.msra.mxu0 0.0
    %87 = vmatprep.subr.mxu0 0.0
    %88 = vmatpush2.msra.mxu0 0.0
    %89 = vmatprep.subr.mxu0 0.0
    %90 = vmatpush2.msra.mxu0 0.0
    %91 = vmatprep.subr.mxu0 0.0
    %92 = vmatpush2.msra.mxu0 0.0
    %93 = vmatprep.subr.mxu0 0.0
    %94 = vmatpush2.msra.mxu0 0.0
    %95 = vmatprep.subr.mxu0 0.0
    %96 = vmatpush2.msra.mxu0 0.0
    %97 = vmatprep.subr.mxu0 0.0
    %98 = vmatpush2.msra.mxu0 0.0
    %99 = vmatprep.subr.mxu0 0.0
    %100 = vmatpush2.msra.mxu0 0.0
    %101 = vmatprep.subr.mxu0 0.0
    %102 = vmatpush2.msra.mxu0 0.0
    %103 = vmatprep.subr.mxu0 0.0
    %104 = vmatpush2.msra.mxu0 0.0
    %105 = vmatprep.subr.mxu0 0.0
    %106 = vmatpush2.msra.mxu0 0.0
    %107 = vmatprep.mubr.f32.mxu0 0.0
    %v108 = vand.u32 %v40, 4294901760
    %v109 = vsub.f32 %v40, %v108
    %v110 = vand.u32 %v109, 4294901760
    %v111 = vsub.f32 %v109, %v110
    %v112 = vand.u32 %v111, 4294901760
    %113 = vmatmul.mubr.f32.gmra.mxu0 %v112
    %v114 = vpop.f32.mrf.mxu0
    %v115 = vadd.f32 0.0, %v114
    %v116 = vpop.f32.mrf.mxu0
    %117 = vdwg.mxu0
    %118 = vmatprep.subr.mxu0 0.0
    %119 = vmatpush1.msra.mxu0 0.0
    %120 = vmatprep.subr.mxu0 0.0
    %121 = vmatpush1.msra.mxu0 0.0
    %122 = vmatprep.subr.mxu0 0.0
    %123 = vmatpush1.msra.mxu0 0.0
    %124 = vmatprep.subr.mxu0 0.0
    %125 = vmatpush1.msra.mxu0 0.0
    %126 = vmatprep.subr.mxu0 0.0
    %127 = vmatpush1.msra.mxu0 0.0
    %128 = vmatprep.subr.mxu0 0.0
    %129 = vmatpush1.msra.mxu0 0.0
    %130 = vmatprep.subr.mxu0 0.0
    %131 = vmatpush1.msra.mxu0 0.0
    %132 = vmatprep.subr.mxu0 0.0
    %133 = vmatpush1.msra.mxu0 0.0
    %134 = vmatprep.subr.mxu0 0.0
    %135 = vmatpush1.msra.mxu0 0.0
    %136 = vmatprep.subr.mxu0 0.0
    %137 = vmatpush1.msra.mxu0 0.0
    %138 = vmatprep.subr.mxu0 0.0
    %139 = vmatpush1.msra.mxu0 0.0
    %140 = vmatprep.subr.mxu0 0.0
    %141 = vmatpush1.msra.mxu0 0.0
    %142 = vmatprep.subr.mxu0 0.0
    %143 = vmatpush1.msra.mxu0 0.0
    %144 = vmatprep.subr.mxu0 0.0
    %145 = vmatpush1.msra.mxu0 0.0
    %146 = vmatprep.subr.mxu0 0.0
    %147 = vmatpush1.msra.mxu0 0.0
    %148 = vmatprep.subr.mxu0 0.0
    %v149 = vand.u32 %v37, 4294901760
    %v150 = vsub.f32 %v37, %v149
    %v151 = vand.u32 %v150, 4294901760
    %v152 = vsub.f32 %v150, %v151
    %v153 = vand.u32 %v152, 4294901760
    %154 = vmatpush1.msra.mxu0 %v153
    %155 = vmatprep.subr.mxu0 0.0
    %156 = vmatpush2.msra.mxu0 0.0
    %157 = vmatprep.subr.mxu0 0.0
    %158 = vmatpush2.msra.mxu0 0.0
    %159 = vmatprep.subr.mxu0 0.0
    %160 = vmatpush2.msra.mxu0 0.0
    %161 = vmatprep.subr.mxu0 0.0
    %162 = vmatpush2.msra.mxu0 0.0
    %163 = vmatprep.subr.mxu0 0.0
    %164 = vmatpush2.msra.mxu0 0.0
    %165 = vmatprep.subr.mxu0 0.0
    %166 = vmatpush2.msra.mxu0 0.0
    %167 = vmatprep.subr.mxu0 0.0
    %168 = vmatpush2.msra.mxu0 0.0
    %169 = vmatprep.subr.mxu0 0.0
    %170 = vmatpush2.msra.mxu0 0.0
    %171 = vmatprep.subr.mxu0 0.0
    %172 = vmatpush2.msra.mxu0 0.0
    %173 = vmatprep.subr.mxu0 0.0
    %174 = vmatpush2.msra.mxu0 0.0
    %175 = vmatprep.subr.mxu0 0.0
    %176 = vmatpush2.msra.mxu0 0.0
    %177 = vmatprep.subr.mxu0 0.0
    %178 = vmatpush2.msra.mxu0 0.0
    %179 = vmatprep.subr.mxu0 0.0
    %180 = vmatpush2.msra.mxu0 0.0
    %181 = vmatprep.subr.mxu0 0.0
    %182 = vmatpush2.msra.mxu0 0.0
    %183 = vmatprep.subr.mxu0 0.0
    %184 = vmatpush2.msra.mxu0 0.0
    %185 = vmatprep.subr.mxu0 0.0
    %186 = vmatpush2.msra.mxu0 0.0
    %187 = vmatprep.mubr.f32.mxu0 0.0
    %v188 = vand.u32 %v40, 4294901760
    %189 = vmatmul.mubr.f32.gmra.mxu0 %v188
    %v190 = vpop.f32.mrf.mxu0
    %v191 = vadd.f32 %v115, %v190
    %v192 = vpop.f32.mrf.mxu0
    %193 = vdwg.mxu0
    %194 = vmatprep.subr.mxu0 0.0
    %195 = vmatpush1.msra.mxu0 0.0
    %196 = vmatprep.subr.mxu0 0.0
    %197 = vmatpush1.msra.mxu0 0.0
    %198 = vmatprep.subr.mxu0 0.0
    %199 = vmatpush1.msra.mxu0 0.0
    %200 = vmatprep.subr.mxu0 0.0
    %201 = vmatpush1.msra.mxu0 0.0
    %202 = vmatprep.subr.mxu0 0.0
    %203 = vmatpush1.msra.mxu0 0.0
    %204 = vmatprep.subr.mxu0 0.0
    %205 = vmatpush1.msra.mxu0 0.0
    %206 = vmatprep.subr.mxu0 0.0
    %207 = vmatpush1.msra.mxu0 0.0
    %208 = vmatprep.subr.mxu0 0.0
    %209 = vmatpush1.msra.mxu0 0.0
    %210 = vmatprep.subr.mxu0 0.0
    %211 = vmatpush1.msra.mxu0 0.0
    %212 = vmatprep.subr.mxu0 0.0
    %213 = vmatpush1.msra.mxu0 0.0
    %214 = vmatprep.subr.mxu0 0.0
    %215 = vmatpush1.msra.mxu0 0.0
    %216 = vmatprep.subr.mxu0 0.0
    %217 = vmatpush1.msra.mxu0 0.0
    %218 = vmatprep.subr.mxu0 0.0
    %219 = vmatpush1.msra.mxu0 0.0
    %220 = vmatprep.subr.mxu0 0.0
    %221 = vmatpush1.msra.mxu0 0.0
    %222 = vmatprep.subr.mxu0 0.0
    %223 = vmatpush1.msra.mxu0 0.0
    %224 = vmatprep.subr.mxu0 0.0
    %v225 = vand.u32 %v37, 4294901760
    %v226 = vsub.f32 %v37, %v225
    %227 = vmatpush1.msra.mxu0 %v226
    %228 = vmatprep.subr.mxu0 0.0
    %229 = vmatpush2.msra.mxu0 0.0
    %230 = vmatprep.subr.mxu0 0.0
    %231 = vmatpush2.msra.mxu0 0.0
    %232 = vmatprep.subr.mxu0 0.0
    %233 = vmatpush2.msra.mxu0 0.0
    %234 = vmatprep.subr.mxu0 0.0
    %235 = vmatpush2.msra.mxu0 0.0
    %236 = vmatprep.subr.mxu0 0.0
    %237 = vmatpush2.msra.mxu0 0.0
    %238 = vmatprep.subr.mxu0 0.0
    %239 = vmatpush2.msra.mxu0 0.0
    %240 = vmatprep.subr.mxu0 0.0
    %241 = vmatpush2.msra.mxu0 0.0
    %242 = vmatprep.subr.mxu0 0.0
    %243 = vmatpush2.msra.mxu0 0.0
    %244 = vmatprep.subr.mxu0 0.0
    %245 = vmatpush2.msra.mxu0 0.0
    %246 = vmatprep.subr.mxu0 0.0
    %247 = vmatpush2.msra.mxu0 0.0
    %248 = vmatprep.subr.mxu0 0.0
    %249 = vmatpush2.msra.mxu0 0.0
    %250 = vmatprep.subr.mxu0 0.0
    %251 = vmatpush2.msra.mxu0 0.0
    %252 = vmatprep.subr.mxu0 0.0
    %253 = vmatpush2.msra.mxu0 0.0
    %254 = vmatprep.subr.mxu0 0.0
    %255 = vmatpush2.msra.mxu0 0.0
    %256 = vmatprep.subr.mxu0 0.0
    %257 = vmatpush2.msra.mxu0 0.0
    %258 = vmatprep.subr.mxu0 0.0
    %259 = vmatpush2.msra.mxu0 0.0
    %260 = vmatprep.mubr.f32.mxu0 0.0
    %v261 = vand.u32 %v40, 4294901760
    %v262 = vsub.f32 %v40, %v261
    %263 = vmatmul.mubr.f32.gmra.mxu0 %v262
    %v264 = vpop.f32.mrf.mxu0
    %v265 = vadd.f32 %v191, %v264
    %v266 = vpop.f32.mrf.mxu0
    %267 = vdwg.mxu0
    %268 = vmatprep.subr.mxu0 0.0
    %269 = vmatpush1.msra.mxu0 0.0
    %270 = vmatprep.subr.mxu0 0.0
    %271 = vmatpush1.msra.mxu0 0.0
    %272 = vmatprep.subr.mxu0 0.0
    %273 = vmatpush1.msra.mxu0 0.0
    %274 = vmatprep.subr.mxu0 0.0
    %275 = vmatpush1.msra.mxu0 0.0
    %276 = vmatprep.subr.mxu0 0.0
    %277 = vmatpush1.msra.mxu0 0.0
    %278 = vmatprep.subr.mxu0 0.0
    %279 = vmatpush1.msra.mxu0 0.0
    %280 = vmatprep.subr.mxu0 0.0
    %281 = vmatpush1.msra.mxu0 0.0
    %282 = vmatprep.subr.mxu0 0.0
    %283 = vmatpush1.msra.mxu0 0.0
    %284 = vmatprep.subr.mxu0 0.0
    %285 = vmatpush1.msra.mxu0 0.0
    %286 = vmatprep.subr.mxu0 0.0
    %287 = vmatpush1.msra.mxu0 0.0
    %288 = vmatprep.subr.mxu0 0.0
    %289 = vmatpush1.msra.mxu0 0.0
    %290 = vmatprep.subr.mxu0 0.0
    %291 = vmatpush1.msra.mxu0 0.0
    %292 = vmatprep.subr.mxu0 0.0
    %293 = vmatpush1.msra.mxu0 0.0
    %294 = vmatprep.subr.mxu0 0.0
    %295 = vmatpush1.msra.mxu0 0.0
    %296 = vmatprep.subr.mxu0 0.0
    %297 = vmatpush1.msra.mxu0 0.0
    %298 = vmatprep.subr.mxu0 0.0
    %v299 = vand.u32 %v37, 4294901760
    %300 = vmatpush1.msra.mxu0 %v299
    %301 = vmatprep.subr.mxu0 0.0
    %302 = vmatpush2.msra.mxu0 0.0
    %303 = vmatprep.subr.mxu0 0.0
    %304 = vmatpush2.msra.mxu0 0.0
    %305 = vmatprep.subr.mxu0 0.0
    %306 = vmatpush2.msra.mxu0 0.0
    %307 = vmatprep.subr.mxu0 0.0
    %308 = vmatpush2.msra.mxu0 0.0
    %309 = vmatprep.subr.mxu0 0.0
    %310 = vmatpush2.msra.mxu0 0.0
    %311 = vmatprep.subr.mxu0 0.0
    %312 = vmatpush2.msra.mxu0 0.0
    %313 = vmatprep.subr.mxu0 0.0
    %314 = vmatpush2.msra.mxu0 0.0
    %315 = vmatprep.subr.mxu0 0.0
    %316 = vmatpush2.msra.mxu0 0.0
    %317 = vmatprep.subr.mxu0 0.0
    %318 = vmatpush2.msra.mxu0 0.0
    %319 = vmatprep.subr.mxu0 0.0
    %320 = vmatpush2.msra.mxu0 0.0
    %321 = vmatprep.subr.mxu0 0.0
    %322 = vmatpush2.msra.mxu0 0.0
    %323 = vmatprep.subr.mxu0 0.0
    %324 = vmatpush2.msra.mxu0 0.0
    %325 = vmatprep.subr.mxu0 0.0
    %326 = vmatpush2.msra.mxu0 0.0
    %327 = vmatprep.subr.mxu0 0.0
    %328 = vmatpush2.msra.mxu0 0.0
    %329 = vmatprep.subr.mxu0 0.0
    %330 = vmatpush2.msra.mxu0 0.0
    %331 = vmatprep.subr.mxu0 0.0
    %332 = vmatpush2.msra.mxu0 0.0
    %333 = vmatprep.mubr.f32.mxu0 0.0
    %v334 = vand.u32 %v40, 4294901760
    %v335 = vsub.f32 %v40, %v334
    %v336 = vand.u32 %v335, 4294901760
    %337 = vmatmul.mubr.f32.gmra.mxu0 %v336
    %v338 = vpop.f32.mrf.mxu0
    %v339 = vadd.f32 %v265, %v338
    %v340 = vpop.f32.mrf.mxu0
    %341 = vdwg.mxu0
    %342 = vmatprep.subr.mxu0 0.0
    %343 = vmatpush1.msra.mxu0 0.0
    %344 = vmatprep.subr.mxu0 0.0
    %345 = vmatpush1.msra.mxu0 0.0
    %346 = vmatprep.subr.mxu0 0.0
    %347 = vmatpush1.msra.mxu0 0.0
    %348 = vmatprep.subr.mxu0 0.0
    %349 = vmatpush1.msra.mxu0 0.0
    %350 = vmatprep.subr.mxu0 0.0
    %351 = vmatpush1.msra.mxu0 0.0
    %352 = vmatprep.subr.mxu0 0.0
    %353 = vmatpush1.msra.mxu0 0.0
    %354 = vmatprep.subr.mxu0 0.0
    %355 = vmatpush1.msra.mxu0 0.0
    %356 = vmatprep.subr.mxu0 0.0
    %357 = vmatpush1.msra.mxu0 0.0
    %358 = vmatprep.subr.mxu0 0.0
    %359 = vmatpush1.msra.mxu0 0.0
    %360 = vmatprep.subr.mxu0 0.0
    %361 = vmatpush1.msra.mxu0 0.0
    %362 = vmatprep.subr.mxu0 0.0
    %363 = vmatpush1.msra.mxu0 0.0
    %364 = vmatprep.subr.mxu0 0.0
    %365 = vmatpush1.msra.mxu0 0.0
    %366 = vmatprep.subr.mxu0 0.0
    %367 = vmatpush1.msra.mxu0 0.0
    %368 = vmatprep.subr.mxu0 0.0
    %369 = vmatpush1.msra.mxu0 0.0
    %370 = vmatprep.subr.mxu0 0.0
    %371 = vmatpush1.msra.mxu0 0.0
    %372 = vmatprep.subr.mxu0 0.0
    %v373 = vand.u32 %v37, 4294901760
    %v374 = vsub.f32 %v37, %v373
    %v375 = vand.u32 %v374, 4294901760
    %376 = vmatpush1.msra.mxu0 %v375
    %377 = vmatprep.subr.mxu0 0.0
    %378 = vmatpush2.msra.mxu0 0.0
    %379 = vmatprep.subr.mxu0 0.0
    %380 = vmatpush2.msra.mxu0 0.0
    %381 = vmatprep.subr.mxu0 0.0
    %382 = vmatpush2.msra.mxu0 0.0
    %383 = vmatprep.subr.mxu0 0.0
    %384 = vmatpush2.msra.mxu0 0.0
    %385 = vmatprep.subr.mxu0 0.0
    %386 = vmatpush2.msra.mxu0 0.0
    %387 = vmatprep.subr.mxu0 0.0
    %388 = vmatpush2.msra.mxu0 0.0
    %389 = vmatprep.subr.mxu0 0.0
    %390 = vmatpush2.msra.mxu0 0.0
    %391 = vmatprep.subr.mxu0 0.0
    %392 = vmatpush2.msra.mxu0 0.0
    %393 = vmatprep.subr.mxu0 0.0
    %394 = vmatpush2.msra.mxu0 0.0
    %395 = vmatprep.subr.mxu0 0.0
    %396 = vmatpush2.msra.mxu0 0.0
    %397 = vmatprep.subr.mxu0 0.0
    %398 = vmatpush2.msra.mxu0 0.0
    %399 = vmatprep.subr.mxu0 0.0
    %400 = vmatpush2.msra.mxu0 0.0
    %401 = vmatprep.subr.mxu0 0.0
    %402 = vmatpush2.msra.mxu0 0.0
    %403 = vmatprep.subr.mxu0 0.0
    %404 = vmatpush2.msra.mxu0 0.0
    %405 = vmatprep.subr.mxu0 0.0
    %406 = vmatpush2.msra.mxu0 0.0
    %407 = vmatprep.subr.mxu0 0.0
    %408 = vmatpush2.msra.mxu0 0.0
    %409 = vmatprep.mubr.f32.mxu0 0.0
    %v410 = vand.u32 %v40, 4294901760
    %411 = vmatmul.mubr.f32.gmra.mxu0 %v410
    %v412 = vpop.f32.mrf.mxu0
    %v413 = vadd.f32 %v339, %v412
    %v414 = vpop.f32.mrf.mxu0
    %415 = vdwg.mxu0
    %416 = vmatprep.subr.mxu0 0.0
    %417 = vmatpush1.msra.mxu0 0.0
    %418 = vmatprep.subr.mxu0 0.0
    %419 = vmatpush1.msra.mxu0 0.0
    %420 = vmatprep.subr.mxu0 0.0
    %421 = vmatpush1.msra.mxu0 0.0
    %422 = vmatprep.subr.mxu0 0.0
    %423 = vmatpush1.msra.mxu0 0.0
    %424 = vmatprep.subr.mxu0 0.0
    %425 = vmatpush1.msra.mxu0 0.0
    %426 = vmatprep.subr.mxu0 0.0
    %427 = vmatpush1.msra.mxu0 0.0
    %428 = vmatprep.subr.mxu0 0.0
    %429 = vmatpush1.msra.mxu0 0.0
    %430 = vmatprep.subr.mxu0 0.0
    %431 = vmatpush1.msra.mxu0 0.0
    %432 = vmatprep.subr.mxu0 0.0
    %433 = vmatpush1.msra.mxu0 0.0
    %434 = vmatprep.subr.mxu0 0.0
    %435 = vmatpush1.msra.mxu0 0.0
    %436 = vmatprep.subr.mxu0 0.0
    %437 = vmatpush1.msra.mxu0 0.0
    %438 = vmatprep.subr.mxu0 0.0
    %439 = vmatpush1.msra.mxu0 0.0
    %440 = vmatprep.subr.mxu0 0.0
    %441 = vmatpush1.msra.mxu0 0.0
    %442 = vmatprep.subr.mxu0 0.0
    %443 = vmatpush1.msra.mxu0 0.0
    %444 = vmatprep.subr.mxu0 0.0
    %445 = vmatpush1.msra.mxu0 0.0
    %446 = vmatprep.subr.mxu0 0.0
    %v447 = vand.u32 %v37, 4294901760
    %448 = vmatpush1.msra.mxu0 %v447
    %449 = vmatprep.subr.mxu0 0.0
    %450 = vmatpush2.msra.mxu0 0.0
    %451 = vmatprep.subr.mxu0 0.0
    %452 = vmatpush2.msra.mxu0 0.0
    %453 = vmatprep.subr.mxu0 0.0
    %454 = vmatpush2.msra.mxu0 0.0
    %455 = vmatprep.subr.mxu0 0.0
    %456 = vmatpush2.msra.mxu0 0.0
    %457 = vmatprep.subr.mxu0 0.0
    %458 = vmatpush2.msra.mxu0 0.0
    %459 = vmatprep.subr.mxu0 0.0
    %460 = vmatpush2.msra.mxu0 0.0
    %461 = vmatprep.subr.mxu0 0.0
    %462 = vmatpush2.msra.mxu0 0.0
    %463 = vmatprep.subr.mxu0 0.0
    %464 = vmatpush2.msra.mxu0 0.0
    %465 = vmatprep.subr.mxu0 0.0
    %466 = vmatpush2.msra.mxu0 0.0
    %467 = vmatprep.subr.mxu0 0.0
    %468 = vmatpush2.msra.mxu0 0.0
    %469 = vmatprep.subr.mxu0 0.0
    %470 = vmatpush2.msra.mxu0 0.0
    %471 = vmatprep.subr.mxu0 0.0
    %472 = vmatpush2.msra.mxu0 0.0
    %473 = vmatprep.subr.mxu0 0.0
    %474 = vmatpush2.msra.mxu0 0.0
    %475 = vmatprep.subr.mxu0 0.0
    %476 = vmatpush2.msra.mxu0 0.0
    %477 = vmatprep.subr.mxu0 0.0
    %478 = vmatpush2.msra.mxu0 0.0
    %479 = vmatprep.subr.mxu0 0.0
    %480 = vmatpush2.msra.mxu0 0.0
    %481 = vmatprep.mubr.f32.mxu0 0.0
    %v482 = vand.u32 %v40, 4294901760
    %483 = vmatmul.mubr.f32.gmra.mxu0 %v482
    %v484 = vpop.f32.mrf.mxu0
    %v485 = vadd.f32 %v413, %v484
    %v486 = vpop.f32.mrf.mxu0
    %487 = vdwg.mxu0
    %v488 = vand.u32 2147483647, %v485
    %vm489 = vcmp.le.f32.partialorder %v488, 0.7853982
    %vm490 = vcmp.lt.s32.totalorder %v485, 0
    %v491 = vand.u32 %v485, 2139095040
    %v492 = vshrl.u32 %v491, 23
    %v493 = vsub.s32 %v492, 127
    %v494 = vand.u32 2147483647, %v485
    %v495 = vand.u32 %v494, 8388607
    %v496 = vor.u32 %v495, 8388608
    %v497 = vsub.s32 0, %v496
    %v498 = vadd.s32 %v493, 1
    %vm499 = vcmp.gt.s32.totalorder %v498, 0
    %v500 = vsel %vm499, %v498, 0
    %v501 = vshrl.u32 %v500, 5
    %v502 = vand.u32 %v500, 31
    %v503 = vsub.s32 32, %v502
    %v504 = vshrl.u32 683565275, %v503
    %v505 = vshll.u32 683565275, %v502
    %v506 = vshrl.u32 2475754826, %v503
    %v507 = vor.u32 %v505, %v506
    %v508 = vshll.u32 2475754826, %v502
    %v509 = vshrl.u32 2131351028, %v503
    %v510 = vor.u32 %v508, %v509
    %v511 = vshll.u32 2131351028, %v502
    %v512 = vshrl.u32 2102212464, %v503
    %v513 = vor.u32 %v511, %v512
    %v514 = vshll.u32 2102212464, %v502
    %v515 = vshrl.u32 920167782, %v503
    %v516 = vor.u32 %v514, %v515
    %v517 = vshll.u32 920167782, %v502
    %v518 = vshrl.u32 1326507024, %v503
    %v519 = vor.u32 %v517, %v518
    %vm520 = vcmp.lt.s32.totalorder %v501, 1
    %vm521 = vcmp.lt.s32.totalorder %v501, 2
    %vm522 = vcmp.lt.s32.totalorder %v501, 3
    %vm523 = vcmp.lt.s32.totalorder %v501, 4
    %v524 = vsel %vm520, %v504, %v507
    %v525 = vsel %vm523, %v513, 2102212464
    %v526 = vsel %vm522, %v510, %v525
    %v527 = vsel %vm521, %v524, %v526
    %v528 = vsel %vm520, %v507, %v510
    %v529 = vsel %vm523, %v516, 920167782
    %v530 = vsel %vm522, %v513, %v529
    %v531 = vsel %vm521, %v528, %v530
    %v532 = vsel %vm520, %v510, %v513
    %v533 = vsel %vm523, %v519, 1326507024
    %v534 = vsel %vm522, %v516, %v533
    %v535 = vsel %vm521, %v532, %v534
    %v536 = vshll.u32 %v496, 8
    %v537 = vmul.u32.u64.compose %v536, %v535
    %v538 = vextract.low.u32 %v537
    %v539 = vextract.high.u32 %v537
    %v540 = vmul.u32.u64.compose %v536, %v531
    %v541 = vextract.low.u32 %v540
    %v542 = vextract.high.u32 %v540
    %v543 = vmul.u32 %v536, %v527
    %v544 = vadd.s32 %v539, %v541
    %vm545 = vc.u32 %v539, %v541
    %v546 = vadd.s32 %v542, 1
    %v547 = vsel %vm545, %v546, %v542
    %v548 = vadd.s32 %v543, %v547
    %v549 = vadd.s32 %v548, 536870912
    %v550 = vshrl.u32 %v549, 30
    %v551 = vshll.u32 %v550, 30
    %v552 = vsub.s32 %v548, %v551
    %vm553 = vcmp.lt.s32.totalorder %v552, 0
    %v554 = vsub.s32 0, %v552
    %v555 = vsel %vm553, %v554, %v552
    %v556 = vclz %v555
    %v557 = vsub.s32 %v556, 2
    %vm558 = vcmp.gt.s32.totalorder 0, %v557
    %v559 = vsel %vm558, 0, %v557
    %v560 = vsub.s32 32, %v559
    %v561 = vshll.u32 %v552, %v559
    %v562 = vshrl.u32 %v544, %v560
    %v563 = vor.u32 %v561, %v562
    %v564 = vsub.s32 4294967266, %v559
    %v565 = vadd.s32 %v564, 127
    %v566 = vshll.u32 %v565, 23
    %v567 = vor.u32 4788187, %v566
    %v568 = vand.u32 2147483647, %v567
    %v570 = vcvt.s32.f32 %v563
    %v571 = vmul.f32 %v570, %v568
    %v572 = vxor.u32 %v571, 2147483648
    %v573 = vsel %vm490, %v572, %v571
    %v574 = vsub.s32 4, %v550
    %v575 = vsel %vm490, %v574, %v550
    %v576 = vsel %vm489, %v485, %v573
    %v577 = vsel %vm489, 0, %v575
    %v578 = vcosq.f32.pop %v576
    %v579 = vsinq.f32.pop %v576
    %vm580 = vweird.f32 %v485
    %v581 = vadd.s32 %v577, 3
    %v582 = vand.u32 %v581, 3
    %vm583 = vcmp.lt.s32.totalorder %v582, 2
    %vm584 = vcmp.eq.s32.totalorder %v582, 0
    %v585 = vxor.u32 %v579, 2147483648
    %v586 = vsel %vm584, %v578, %v585
    %vm587 = vcmp.eq.s32.totalorder %v582, 2
    %v588 = vxor.u32 %v578, 2147483648
    %v589 = vsel %vm587, %v588, %v579
    %v590 = vsel %vm583, %v586, %v589
    %v591 = vsel %vm580, nan, %v590
    %592 = vst [vmem:[#allocation7] sm:$0xff] %v591
    // Predicated region
    $region18: #{tpu_custom_call.1} parent=1 // pred_check
      _
    $region19: #{tpu_custom_call.1} parent=1 // pred_check_branch
      %594 = sbr.rel (0) target = $region21
    $region20: #{tpu_custom_call.1} parent=1 // pred_region
      %s596 = ssub.s32 128, 128
      %597 = vsyncadd [#allocation4], %s596
      %s599 = sshll.u32 [#allocation7], 4
      %s600 = int_to_ptr.vmem [resolvable:$true] %s599
      %602 = dma.vmem_to_hbm [thread:$0]  %s600, 128, %s2, [#allocation4]
    $region21: #{tpu_custom_call.1} parent=1 // pred_fallthru
      _
    // Predicated region
    $region22: #{tpu_custom_call.1} parent=1 // pred_check
      _
    $region23: #{tpu_custom_call.1} parent=1 // pred_check_branch
      %604 = sbr.rel (0) target = $region25
    $region24: #{tpu_custom_call.1} parent=1 // pred_region
      %605 = dma.done [#allocation4], 128
    $region25: #{tpu_custom_call.1} parent=1 // pred_fallthru
      _
    %606 = vsyncpa [#allocation3], 1
    %607 = vsyncpa [#allocation6], 1
    %608 = vsyncpa [#allocation4], 1

</llo_original>
